<compile_context>
chip_gen: v6e
topology: v6e:2x2x1
jax: 0.10.0
libtpu: 0.0.40
codegen_flags: <defaults>
</compile_context>

<pallas_src>
import jax
import jax.numpy as jnp
import numpy as np
from jax import lax
from jax.experimental import pallas as pl
from jax.experimental.pallas import tpu as pltpu


def _round_up(x, m):
    return ((x + m - 1) // m) * m


# ---------------------------------------------------------------------------
# Pass 1: node projections.
# ---------------------------------------------------------------------------
def _proj_kernel(h_ref, w_ref, wa1_ref, wa2t_ref, wh_ref, wh1_ref, wh2_ref):
    h = h_ref[...]                                            # [TR1, F_in] f32

    # Lane-dense projection on the MXU: bf16 operands, f32 accumulation.
    wh = jnp.dot(h.astype(jnp.bfloat16), w_ref[...],
                 preferred_element_type=jnp.float32)          # [TR1, F_pad]
    wh_ref[...] = wh.astype(jnp.bfloat16)

    # Attention-logit projections stay f32 (tiny matvecs; keeps softmax sharp).
    wh1_ref[...] = jnp.dot(h, wa1_ref[...],
                           preferred_element_type=jnp.float32)    # [TR1, 1]

    # Lane-dense [1, TR1] row via dot_general (no [N,1] -> [1,N] transpose).
    wh2_ref[...] = lax.dot_general(
        wa2t_ref[...], h,
        dimension_numbers=(((1,), (1,)), ((), ())),
        preferred_element_type=jnp.float32)                   # [1, TR1]


# ---------------------------------------------------------------------------
# Pass 2: online-softmax attention + aggregation + ELU (flash style).
# ---------------------------------------------------------------------------
def _attn_kernel(blkmap_ref, wh1_ref, wh2_ref, bias_ref, wh_ref, out_ref,
                 m_sc, l_sc, acc_sc):
    i = pl.program_id(0)
    j = pl.program_id(1)
    nc = pl.num_programs(1)

    @pl.when(j == 0)
    def _init():
        m_sc[...] = jnp.full_like(m_sc, -jnp.inf)
        l_sc[...] = jnp.zeros_like(l_sc)
        acc_sc[...] = jnp.zeros_like(acc_sc)

    # Skip all compute for adjacency blocks with no edges (block-sparse graphs).
    @pl.when(blkmap_ref[i, j] > 0)
    def _compute():
        # e[r, c] = leakyrelu(wh1[r] + wh2[c]) + bias[r, c]  (bias in {0, -1e11})
        e = wh1_ref[...] + wh2_ref[...]              # [TR,1] + [1,TC] -> [TR,TC]
        e = jnp.maximum(e, jnp.float32(0.01) * e)    # nn.LeakyReLU default slope
        e = e + bias_ref[...].astype(jnp.float32)    # additive mask == ref's where()

        m_prev = m_sc[...]
        m_new = jnp.maximum(m_prev, jnp.max(e, axis=-1, keepdims=True))
        alpha = jnp.exp(m_prev - m_new)
        p = jnp.exp(e - m_new)                       # exp(-1e11 - m) underflows to 0
        l_sc[...] = alpha * l_sc[...] + jnp.sum(p, axis=-1, keepdims=True)
        acc_sc[...] = alpha * acc_sc[...] + jnp.dot(
            p.astype(jnp.bfloat16), wh_ref[...],
            preferred_element_type=jnp.float32)      # [TR, F_pad] f32 accumulate
        m_sc[...] = m_new

    @pl.when(j == nc - 1)
    def _finalize():
        # Guard: rows whose every block was skipped (padding) would give l == 0.
        denom = jnp.maximum(l_sc[...], jnp.float32(1e-30))
        r = pl.reciprocal(denom, approx=True)        # EUP vrcp (free slot)
        r = r * (2.0 - denom * r)                    # one Newton step -> ~f32 exact
        h_new = acc_sc[...] * r
        # ELU (alpha = 1.0).
        out_ref[...] = jnp.where(h_new > 0, h_new, jnp.exp(h_new) - 1.0)


# ---------------------------------------------------------------------------
# Wrapper: folding, padding, block maps, BlockSpecs.
# ---------------------------------------------------------------------------
def gat_layer(h, adj, w, a1, a2, *, tile_rows=128, tile_cols=512,
              tile_rows_proj=512, interpret=False):
    """Single-head GAT forward.

    PyTorch parameter layout:
      h:   [N, F_in]      node features (f32)
      adj: [N, N]         adjacency (any dtype; only `adj > 0` is used)
      w:   [F_out, F_in]  linear_w.weight
      a1:  [1, F_out]     linear_a_1.weight
      a2:  [1, F_out]     linear_a_2.weight
    Returns [N, F_out] float32.

    NOTE: like the original module, rows with zero unmasked neighbors degenerate
    to (near-)uniform attention; provide self loops for meaningful results.
    """
    n, f_in = h.shape
    f_out = w.shape[0]

    # ---- fold a1/a2 into the input projection (tiny O(F^2) XLA ops) --------
    w_t = w.astype(jnp.float32).T                        # [F_in, F_out]
    wa1 = w_t @ a1.astype(jnp.float32).T                 # [F_in, 1]
    wa2t = (w_t @ a2.astype(jnp.float32).T).T            # [1, F_in]

    # ---- padding / tile selection ------------------------------------------
    f_pad = max(128, _round_up(f_out, 128))              # lane-dense feature dim
    n_pad = _round_up(n, 128)

    def _divisor_tile(pref):
        t = 128
        while t * 2 <= pref and n_pad % (t * 2) == 0:
            t *= 2
        return t

    tr = _divisor_tile(max(128, tile_rows))               # pass-2 row tile
    tc = _divisor_tile(max(128, tile_cols))               # pass-2 column tile
    tr1 = _divisor_tile(max(128, tile_rows_proj))          # pass-1 row tile

    w_pad = jnp.zeros((f_in, f_pad), jnp.float32).at[:, :f_out].set(w_t)
    w_pad = w_pad.astype(jnp.bfloat16)

    h_p = jnp.zeros((n_pad, f_in), jnp.float32).at[:n, :].set(h.astype(jnp.float32))

    # Additive mask (0 for edges, -1e11 for non-edges / padding) stored in bf16:
    # exact reference masking semantics, 2 bytes/elem HBM, no int8 compare on VPU.
    adj_pad = jnp.zeros((n_pad, n_pad), jnp.bool_).at[:n, :n].set(adj > 0)
    bias = jnp.where(adj_pad, jnp.float32(0.0),
                     jnp.float32(-100000000000.0)).astype(jnp.bfloat16)

    # Per-block "has any edge" map (scalar-prefetched into SMEM for block skipping).
    nr, ncb = n_pad // tr, n_pad // tc
    blkmap = adj_pad.reshape(nr, tr, ncb, tc).any(axis=(1, 3)).astype(jnp.int32)

    cparams1 = pltpu.CompilerParams(
        dimension_semantics=("parallel",),
        vmem_limit_bytes=48 * 1024 * 1024)
    cparams2 = pltpu.CompilerParams(
        dimension_semantics=("parallel", "arbitrary"),   # reduction axis last
        vmem_limit_bytes=48 * 1024 * 1024)               # v7x headroom (64 MiB phys)

    # ---- pass 1: projections ------------------------------------------------
    wh, wh1, wh2row = pl.pallas_call(
        _proj_kernel,
        out_shape=(jax.ShapeDtypeStruct((n_pad, f_pad), jnp.bfloat16),
                   jax.ShapeDtypeStruct((n_pad, 1), jnp.float32),
                   jax.ShapeDtypeStruct((1, n_pad), jnp.float32)),
        grid_spec=pltpu.PrefetchScalarGridSpec(
            num_scalar_prefetch=0,
            grid=(n_pad // tr1,),
            in_specs=[
                pl.BlockSpec((tr1, f_in), lambda i: (i, 0)),     # h row tile
                pl.BlockSpec((f_in, f_pad), lambda i: (0, 0)),   # W (bf16)
                pl.BlockSpec((f_in, 1), lambda i: (0, 0)),       # W^T a1
                pl.BlockSpec((1, f_in), lambda i: (0, 0)),       # (W^T a2)^T
            ],
            out_specs=[
                pl.BlockSpec((tr1, f_pad), lambda i: (i, 0)),    # wh (bf16)
                pl.BlockSpec((tr1, 1), lambda i: (i, 0)),        # wh1 column
                pl.BlockSpec((1, tr1), lambda i: (0, i)),        # wh2 row
            ]),
        compiler_params=cparams1,
        interpret=interpret,
    )(h_p, w_pad, wa1, wa2t)

    # ---- pass 2: online-softmax attention + aggregation + ELU ---------------
    out = pl.pallas_call(
        _attn_kernel,
        out_shape=jax.ShapeDtypeStruct((n_pad, f_pad), jnp.float32),
        grid_spec=pltpu.PrefetchScalarGridSpec(
            num_scalar_prefetch=1,                               # blkmap -> SMEM
            grid=(nr, ncb),
            in_specs=[
                pl.BlockSpec((tr, 1), lambda i, j, blk: (i, 0)),      # wh1 rows
                pl.BlockSpec((1, tc), lambda i, j, blk: (0, j)),      # wh2 cols
                pl.BlockSpec((tr, tc), lambda i, j, blk: (i, j)),     # bias block
                pl.BlockSpec((tc, f_pad), lambda i, j, blk: (j, 0)),  # wh col tile
            ],
            out_specs=pl.BlockSpec((tr, f_pad), lambda i, j, blk: (i, 0)),
            scratch_shapes=[
                pltpu.VMEM((tr, 1), jnp.float32),                # m (running max)
                pltpu.VMEM((tr, 1), jnp.float32),                # l (running sum)
                pltpu.VMEM((tr, f_pad), jnp.float32),            # acc
            ]),
        compiler_params=cparams2,
        interpret=interpret,
    )(blkmap, wh1, wh2row, bias, wh)

    return out[:n, :f_out]


# ---------------------------------------------------------------------------
# Pure-JAX f32 reference mirroring the PyTorch module.
# ---------------------------------------------------------------------------
def _reference(h, adj, w, a1, a2):
    wh = h @ w.T
    e = (wh @ a1.T) + (wh @ a2.T).T
    e = jnp.where(e > 0, e, 0.01 * e)                   # LeakyReLU(0.01)
    attn = jnp.where(adj > 0, e, jnp.float32(-100000000000.0))
    attn = jax.nn.softmax(attn, axis=-1)
    h_new = attn @ wh
    return jnp.where(h_new > 0, h_new, jnp.exp(h_new) - 1.0)   # ELU


if __name__ == "__main__":
    N, F_IN, F_OUT = 256, 32, 64
    key = jax.random.PRNGKey(0)
    k_h, k_adj, k_w, k_a1, k_a2 = jax.random.split(key, 5)

    h = jax.random.normal(k_h, (N, F_IN), dtype=jnp.float32)
    # Sparse adjacency with self loops (avoids the all-masked-row corner case).
    adj = (jax.random.uniform(k_adj, (N, N)) < 0.1).astype(jnp.float32)
    adj = jnp.maximum(adj, jnp.eye(N, dtype=jnp.float32))

    # PyTorch-style init: uniform(-1/sqrt(fan_in), 1/sqrt(fan_in)).
    bw = 1.0 / np.sqrt(F_IN)
    w = jax.random.uniform(k_w, (F_OUT, F_IN), minval=-bw, maxval=bw,
                           dtype=jnp.float32)            # linear_w.weight
    ba = 1.0 / np.sqrt(F_OUT)
    a1 = jax.random.uniform(k_a1, (1, F_OUT), minval=-ba, maxval=ba,
                            dtype=jnp.float32)           # linear_a_1.weight
    a2 = jax.random.uniform(k_a2, (1, F_OUT), minval=-ba, maxval=ba,
                            dtype=jnp.float32)           # linear_a_2.weight

    out = gat_layer(h, adj, w, a1, a2)
    out = jax.block_until_ready(out)

    ref = _reference(h, adj, w, a1, a2)
    # Tolerance accounts for bf16 MXU operands (f32 accumulation) vs f32 reference.
    np.testing.assert_allclose(np.asarray(out), np.asarray(ref),
                               rtol=2e-2, atol=2e-2)
    print("KERNEL_OK")
</pallas_src>

<mosaic_0001>
module attributes {stable_mosaic.version = 11 : i64} {
  func.func @_proj_kernel(%arg0: i32, %arg1: memref<256x32xf32, #tpu.memory_space<vmem>>, %arg2: memref<32x128xbf16, #tpu.memory_space<vmem>>, %arg3: memref<32x1xf32, #tpu.memory_space<vmem>>, %arg4: memref<1x32xf32, #tpu.memory_space<vmem>>, %arg5: memref<256x128xbf16, #tpu.memory_space<vmem>>, %arg6: memref<256x1xf32, #tpu.memory_space<vmem>>, %arg7: memref<1x256xf32, #tpu.memory_space<vmem>>) attributes {dimension_semantics = [#tpu.dimension_semantics<parallel>], iteration_bounds = array<i64: 1>, scalar_prefetch = 0 : i64, scratch_operands = 0 : i64, tpu.core_type = #tpu.core_type<tc>, window_params = [{transform_indices = @transform_0, window_bounds = array<i64: 256, 32>}, {pipeline_mode = #tpu.pipeline_mode<synchronous>, transform_indices = @transform_1, window_bounds = array<i64: 32, 128>}, {pipeline_mode = #tpu.pipeline_mode<synchronous>, transform_indices = @transform_2, window_bounds = array<i64: 32, 1>}, {pipeline_mode = #tpu.pipeline_mode<synchronous>, transform_indices = @transform_3, window_bounds = array<i64: 1, 32>}, {transform_indices = @transform_4, window_bounds = array<i64: 256, 128>}, {transform_indices = @transform_5, window_bounds = array<i64: 256, 1>}, {transform_indices = @transform_6, window_bounds = array<i64: 1, 256>}]} {
    %c0 = arith.constant 0 : index
    %c0_0 = arith.constant 0 : index
    %0 = vector.load %arg1[%c0, %c0_0] : memref<256x32xf32, #tpu.memory_space<vmem>>, vector<256x32xf32>
    %1 = arith.truncf %0 : vector<256x32xf32> to vector<256x32xbf16>
    %c0_1 = arith.constant 0 : index
    %c0_2 = arith.constant 0 : index
    %2 = vector.load %arg2[%c0_1, %c0_2] : memref<32x128xbf16, #tpu.memory_space<vmem>>, vector<32x128xbf16>
    %cst = arith.constant dense<0.000000e+00> : vector<256x128xf32>
    %3 = tpu.matmul %1, %2, %cst {dimension_numbers = #tpu.dot_dimension_numbers<[1], [0], [0], [1], [0, 0, 1, 1], [], []>} : vector<256x32xbf16>, vector<32x128xbf16>, vector<256x128xf32> -> vector<256x128xf32>
    %4 = arith.truncf %3 : vector<256x128xf32> to vector<256x128xbf16>
    %c0_3 = arith.constant 0 : index
    %c0_4 = arith.constant 0 : index
    %5 = vector.load %arg5[%c0_3, %c0_4] : memref<256x128xbf16, #tpu.memory_space<vmem>>, vector<256x128xbf16>
    tpu.vector_store %arg5[%c0_3, %c0_4], %4 {strides = array<i32>} : memref<256x128xbf16, #tpu.memory_space<vmem>>, vector<256x128xbf16>,
    %c0_5 = arith.constant 0 : index
    %c0_6 = arith.constant 0 : index
    %6 = vector.load %arg3[%c0_5, %c0_6] : memref<32x1xf32, #tpu.memory_space<vmem>>, vector<32x1xf32>
    %cst_7 = arith.constant dense<0.000000e+00> : vector<256x1xf32>
    %7 = tpu.matmul %0, %6, %cst_7 {dimension_numbers = #tpu.dot_dimension_numbers<[1], [0], [0], [1], [0, 0, 1, 1], [], []>} : vector<256x32xf32>, vector<32x1xf32>, vector<256x1xf32> -> vector<256x1xf32>
    %c0_8 = arith.constant 0 : index
    %c0_9 = arith.constant 0 : index
    %8 = vector.load %arg6[%c0_8, %c0_9] : memref<256x1xf32, #tpu.memory_space<vmem>>, vector<256x1xf32>
    tpu.vector_store %arg6[%c0_8, %c0_9], %7 {strides = array<i32>} : memref<256x1xf32, #tpu.memory_space<vmem>>, vector<256x1xf32>,
    %c0_10 = arith.constant 0 : index
    %c0_11 = arith.constant 0 : index
    %9 = vector.load %arg4[%c0_10, %c0_11] : memref<1x32xf32, #tpu.memory_space<vmem>>, vector<1x32xf32>
    %cst_12 = arith.constant dense<0.000000e+00> : vector<1x256xf32>
    %10 = tpu.matmul %9, %0, %cst_12 {dimension_numbers = #tpu.dot_dimension_numbers<[1], [1], [0], [0], [0, 0, 1, 0], [], []>} : vector<1x32xf32>, vector<256x32xf32>, vector<1x256xf32> -> vector<1x256xf32>
    %c0_13 = arith.constant 0 : index
    %c0_14 = arith.constant 0 : index
    %11 = vector.load %arg7[%c0_13, %c0_14] : memref<1x256xf32, #tpu.memory_space<vmem>>, vector<1x256xf32>
    tpu.vector_store %arg7[%c0_13, %c0_14], %10 {strides = array<i32>} : memref<1x256xf32, #tpu.memory_space<vmem>>, vector<1x256xf32>,
    return
  }
  func.func @transform_0(%arg0: i32) -> (i32, i32) {
    %c0_i32 = arith.constant 0 : i32
    %c0_i32_0 = arith.constant 0 : i32
    return %arg0, %c0_i32 : i32, i32
  }
  func.func @transform_1(%arg0: i32) -> (i32, i32) {
    %c0_i32 = arith.constant 0 : i32
    %c0_i32_0 = arith.constant 0 : i32
    %c0_i32_1 = arith.constant 0 : i32
    return %c0_i32, %c0_i32_0 : i32, i32
  }
  func.func @transform_2(%arg0: i32) -> (i32, i32) {
    %c0_i32 = arith.constant 0 : i32
    %c0_i32_0 = arith.constant 0 : i32
    %c0_i32_1 = arith.constant 0 : i32
    return %c0_i32, %c0_i32_0 : i32, i32
  }
  func.func @transform_3(%arg0: i32) -> (i32, i32) {
    %c0_i32 = arith.constant 0 : i32
    %c0_i32_0 = arith.constant 0 : i32
    %c0_i32_1 = arith.constant 0 : i32
    return %c0_i32, %c0_i32_0 : i32, i32
  }
  func.func @transform_4(%arg0: i32) -> (i32, i32) {
    %c0_i32 = arith.constant 0 : i32
    %c0_i32_0 = arith.constant 0 : i32
    return %arg0, %c0_i32 : i32, i32
  }
  func.func @transform_5(%arg0: i32) -> (i32, i32) {
    %c0_i32 = arith.constant 0 : i32
    %c0_i32_0 = arith.constant 0 : i32
    return %arg0, %c0_i32 : i32, i32
  }
  func.func @transform_6(%arg0: i32) -> (i32, i32) {
    %c0_i32 = arith.constant 0 : i32
    %c0_i32_0 = arith.constant 0 : i32
    return %c0_i32, %arg0 : i32, i32
  }
}

</mosaic_0001>

<llo_original>
// kernel: tpu_custom_call.1
$region0: #{tpu_custom_call.1}
  #allocation0 [shape = 'u32[]', space=smem, size = 0x4, offset = 0x4, fixed_abs, tag = 'smem constant byte address 0x4 - core index']
  #allocation1 [shape = 'u32[144,128]{1,0:T(1,128)}', space=vmem, size = 0x12000, scoped, tag = 'internal scratch']
  %s0 = inlined_call_operand.vmem [shape: f32[256,32], index: 0, kind: input, shape index: {}]
  %s1 = inlined_call_operand.vmem [shape: bf16[32,128], index: 1, kind: input, shape index: {}]
  %s2 = inlined_call_operand.vmem [shape: f32[32,1], index: 2, kind: input, shape index: {}]
  %s3 = inlined_call_operand.vmem [shape: f32[1,32], index: 3, kind: input, shape index: {}]
  %s4 = inlined_call_operand.hbm [shape: bf16[256,128], index: 4, kind: output, shape index: {0}]
  %s5 = inlined_call_operand.vmem [shape: f32[256,1], index: 5, kind: output, shape index: {1}]
  %s6 = inlined_call_operand.hbm [shape: f32[1,256], index: 6, kind: output, shape index: {2}]
  %7 = xla_tuple %s4, %s5, %s6
  %s8 = sld [smem:[#allocation0]]
  $region42: #{tpu_custom_call.1} parent=0
    _
  %s10 = ssub.s32 1, %s8
  %s11 = scalar_select 0, %s10, %s8
  $region1: #{tpu_custom_call.1} parent=0
    #allocation2 [shape = 'u8[65536]{0}', space=vmem, size = 0x10000, scoped, tag = 'output window, operand 0, single buffered']
    #allocation3 [shape = 's32[1]{0}', space=sflag, size = 0x4, scoped, tag = 'scoped memory for tpu_custom_call.1']
    #allocation4 [shape = 'u8[1024]{0}', space=vmem, size = 0x400, scoped, tag = 'output window, operand 2, single buffered']
    #allocation5 [shape = 's32[1]{0}', space=sflag, size = 0x4, scoped, tag = 'scoped memory for tpu_custom_call.1']
    %12 = vsyncpa [#allocation3], 0
    %13 = vsyncpa [#allocation5], 0
    // Predicated region
    $region2: #{tpu_custom_call.1} parent=1 // pred_check
      _
    $region3: #{tpu_custom_call.1} parent=1 // pred_check_branch
      %15 = sbr.rel (0) target = $region5
    $region4: #{tpu_custom_call.1} parent=1 // pred_region
      _
    $region5: #{tpu_custom_call.1} parent=1 // pred_fallthru
      _
    // Predicated region
    $region6: #{tpu_custom_call.1} parent=1 // pred_check
      _
    $region7: #{tpu_custom_call.1} parent=1 // pred_check_branch
      %17 = sbr.rel (0) target = $region9
    $region8: #{tpu_custom_call.1} parent=1 // pred_region
      _
    $region9: #{tpu_custom_call.1} parent=1 // pred_fallthru
      _
    // Predicated region
    $region10: #{tpu_custom_call.1} parent=1 // pred_check
      _
    $region11: #{tpu_custom_call.1} parent=1 // pred_check_branch
      %19 = sbr.rel (0) target = $region13
    $region12: #{tpu_custom_call.1} parent=1 // pred_region
      _
    $region13: #{tpu_custom_call.1} parent=1 // pred_fallthru
      _
    // Predicated region
    $region14: #{tpu_custom_call.1} parent=1 // pred_check
      _
    $region15: #{tpu_custom_call.1} parent=1 // pred_check_branch
      %21 = sbr.rel (0) target = $region17
    $region16: #{tpu_custom_call.1} parent=1 // pred_region
      _
    $region17: #{tpu_custom_call.1} parent=1 // pred_fallthru
      _
    %v23 = vld [vmem:[%s0] sm:$0xff]
    %v24 = vld [vmem:[%s0 + $0x8] sm:$0xff]
    %v25 = vld [vmem:[%s0 + $0x10] sm:$0xff]
    %v26 = vld [vmem:[%s0 + $0x18] sm:$0xff]
    %v27 = vld [vmem:[%s0 + $0x20] sm:$0xff]
    %v28 = vld [vmem:[%s0 + $0x28] sm:$0xff]
    %v29 = vld [vmem:[%s0 + $0x30] sm:$0xff]
    %v30 = vld [vmem:[%s0 + $0x38] sm:$0xff]
    %v31 = vld [vmem:[%s0 + $0x40] sm:$0xff]
    %v32 = vld [vmem:[%s0 + $0x48] sm:$0xff]
    %v33 = vld [vmem:[%s0 + $0x50] sm:$0xff]
    %v34 = vld [vmem:[%s0 + $0x58] sm:$0xff]
    %v35 = vld [vmem:[%s0 + $0x60] sm:$0xff]
    %v36 = vld [vmem:[%s0 + $0x68] sm:$0xff]
    %v37 = vld [vmem:[%s0 + $0x70] sm:$0xff]
    %v38 = vld [vmem:[%s0 + $0x78] sm:$0xff]
    %v39 = vld [vmem:[%s0 + $0x80] sm:$0xff]
    %v40 = vld [vmem:[%s0 + $0x88] sm:$0xff]
    %v41 = vld [vmem:[%s0 + $0x90] sm:$0xff]
    %v42 = vld [vmem:[%s0 + $0x98] sm:$0xff]
    %v43 = vld [vmem:[%s0 + $0xa0] sm:$0xff]
    %v44 = vld [vmem:[%s0 + $0xa8] sm:$0xff]
    %v45 = vld [vmem:[%s0 + $0xb0] sm:$0xff]
    %v46 = vld [vmem:[%s0 + $0xb8] sm:$0xff]
    %v47 = vld [vmem:[%s0 + $0xc0] sm:$0xff]
    %v48 = vld [vmem:[%s0 + $0xc8] sm:$0xff]
    %v49 = vld [vmem:[%s0 + $0xd0] sm:$0xff]
    %v50 = vld [vmem:[%s0 + $0xd8] sm:$0xff]
    %v51 = vld [vmem:[%s0 + $0xe0] sm:$0xff]
    %v52 = vld [vmem:[%s0 + $0xe8] sm:$0xff]
    %v53 = vld [vmem:[%s0 + $0xf0] sm:$0xff]
    %v54 = vld [vmem:[%s0 + $0xf8] sm:$0xff]
    %v55 = vpack.c.bf16 %v24, %v23
    %v56 = vpack.c.bf16 %v26, %v25
    %v57 = vpack.c.bf16 %v28, %v27
    %v58 = vpack.c.bf16 %v30, %v29
    %v59 = vpack.c.bf16 %v32, %v31
    %v60 = vpack.c.bf16 %v34, %v33
    %v61 = vpack.c.bf16 %v36, %v35
    %v62 = vpack.c.bf16 %v38, %v37
    %v63 = vpack.c.bf16 %v40, %v39
    %v64 = vpack.c.bf16 %v42, %v41
    %v65 = vpack.c.bf16 %v44, %v43
    %v66 = vpack.c.bf16 %v46, %v45
    %v67 = vpack.c.bf16 %v48, %v47
    %v68 = vpack.c.bf16 %v50, %v49
    %v69 = vpack.c.bf16 %v52, %v51
    %v70 = vpack.c.bf16 %v54, %v53
    %v71 = vld [vmem:[%s1] sm:$0xf]
    %v72 = vld [vmem:[%s1 + $0x4] sm:$0xf]
    %v73 = vld [vmem:[%s1 + $0x8] sm:$0xf]
    %v74 = vld [vmem:[%s1 + $0xc] sm:$0xf]
    %v79 = vunpack.c.l.b16 %v71
    %v80 = vunpack.c.l.b16 %v72
    %v81 = vunpack.c.l.b16 %v73
    %v82 = vunpack.c.l.b16 %v74
    %v83 = vpack.c.b16 %v80, %v79
    %v84 = vpack.c.b16 %v82, %v81
    %vm87 = vcmask 261120
    %v89 = vsel %vm87, %v55, 0
    %v92 = vsel %vm87, %v56, 0
    %v95 = vsel %vm87, %v57, 0
    %v98 = vsel %vm87, %v58, 0
    %v101 = vsel %vm87, %v59, 0
    %v104 = vsel %vm87, %v60, 0
    %v107 = vsel %vm87, %v61, 0
    %v110 = vsel %vm87, %v62, 0
    %v113 = vsel %vm87, %v63, 0
    %v116 = vsel %vm87, %v64, 0
    %v119 = vsel %vm87, %v65, 0
    %v122 = vsel %vm87, %v66, 0
    %v125 = vsel %vm87, %v67, 0
    %v128 = vsel %vm87, %v68, 0
    %v131 = vsel %vm87, %v69, 0
    %v134 = vsel %vm87, %v70, 0
    %136 = vmatprep.subr.bf16.mxu0 0
    %137 = vmatpush1.bf16.msra.mxu0 0
    %138 = vmatprep.subr.bf16.mxu0 0
    %139 = vmatpush1.bf16.msra.mxu0 0
    %140 = vmatprep.subr.bf16.mxu0 0
    %141 = vmatpush1.bf16.msra.mxu0 0
    %142 = vmatprep.subr.bf16.mxu0 0
    %143 = vmatpush1.bf16.msra.mxu0 0
    %144 = vmatprep.subr.bf16.mxu0 0
    %145 = vmatpush1.bf16.msra.mxu0 0
    %146 = vmatprep.subr.bf16.mxu0 0
    %147 = vmatpush1.bf16.msra.mxu0 0
    %148 = vmatprep.subr.bf16.mxu0 0
    %149 = vmatpush1.bf16.msra.mxu0 %v84
    %150 = vmatprep.subr.bf16.mxu0 0
    %151 = vmatpush1.bf16.msra.mxu0 %v83
    %152 = vmatprep.subr.bf16.mxu0 0
    %153 = vmatpush2.bf16.msra.mxu0 0
    %154 = vmatprep.subr.bf16.mxu0 0
    %155 = vmatpush2.bf16.msra.mxu0 0
    %156 = vmatprep.subr.bf16.mxu0 0
    %157 = vmatpush2.bf16.msra.mxu0 0
    %158 = vmatprep.subr.bf16.mxu0 0
    %159 = vmatpush2.bf16.msra.mxu0 0
    %160 = vmatprep.subr.bf16.mxu0 0
    %161 = vmatpush2.bf16.msra.mxu0 0
    %162 = vmatprep.subr.bf16.mxu0 0
    %163 = vmatpush2.bf16.msra.mxu0 0
    %164 = vmatprep.subr.bf16.mxu0 0
    %165 = vmatpush2.bf16.msra.mxu0 0
    %166 = vmatprep.subr.bf16.mxu0 0
    %167 = vmatpush2.bf16.msra.mxu0 0
    %168 = vmatprep.mubr.bf16.mxu0 0
    %169 = vmatmul.mubr.bf16.gmra.mxu0 %v89
    %v170 = vpop.f32.mrf.mxu0
    %v171 = vadd.f32 0.0, %v170
    %v172 = vpop.f32.mrf.mxu0
    %v173 = vpop.f32.mrf.mxu0
    %v174 = vadd.f32 0.0, %v173
    %v175 = vpop.f32.mrf.mxu0
    %176 = vmatprep.mubr.bf16.mxu0 0
    %177 = vmatmul.mubr.bf16.gmra.mxu0 %v92
    %v178 = vpop.f32.mrf.mxu0
    %v179 = vadd.f32 0.0, %v178
    %v180 = vpop.f32.mrf.mxu0
    %v181 = vpop.f32.mrf.mxu0
    %v182 = vadd.f32 0.0, %v181
    %v183 = vpop.f32.mrf.mxu0
    %184 = vmatprep.mubr.bf16.mxu0 0
    %185 = vmatmul.mubr.bf16.gmra.mxu0 %v95
    %v186 = vpop.f32.mrf.mxu0
    %v187 = vadd.f32 0.0, %v186
    %v188 = vpop.f32.mrf.mxu0
    %v189 = vpop.f32.mrf.mxu0
    %v190 = vadd.f32 0.0, %v189
    %v191 = vpop.f32.mrf.mxu0
    %192 = vmatprep.mubr.bf16.mxu0 0
    %193 = vmatmul.mubr.bf16.gmra.mxu0 %v98
    %v194 = vpop.f32.mrf.mxu0
    %v195 = vadd.f32 0.0, %v194
    %v196 = vpop.f32.mrf.mxu0
    %v197 = vpop.f32.mrf.mxu0
    %v198 = vadd.f32 0.0, %v197
    %v199 = vpop.f32.mrf.mxu0
    %200 = vmatprep.mubr.bf16.mxu0 0
    %201 = vmatmul.mubr.bf16.gmra.mxu0 %v101
    %v202 = vpop.f32.mrf.mxu0
    %v203 = vadd.f32 0.0, %v202
    %v204 = vpop.f32.mrf.mxu0
    %v205 = vpop.f32.mrf.mxu0
    %v206 = vadd.f32 0.0, %v205
    %v207 = vpop.f32.mrf.mxu0
    %208 = vmatprep.mubr.bf16.mxu0 0
    %209 = vmatmul.mubr.bf16.gmra.mxu0 %v104
    %v210 = vpop.f32.mrf.mxu0
    %v211 = vadd.f32 0.0, %v210
    %v212 = vpop.f32.mrf.mxu0
    %v213 = vpop.f32.mrf.mxu0
    %v214 = vadd.f32 0.0, %v213
    %v215 = vpop.f32.mrf.mxu0
    %216 = vmatprep.mubr.bf16.mxu0 0
    %217 = vmatmul.mubr.bf16.gmra.mxu0 %v107
    %v218 = vpop.f32.mrf.mxu0
    %v219 = vadd.f32 0.0, %v218
    %v220 = vpop.f32.mrf.mxu0
    %v221 = vpop.f32.mrf.mxu0
    %v222 = vadd.f32 0.0, %v221
    %v223 = vpop.f32.mrf.mxu0
    %224 = vmatprep.mubr.bf16.mxu0 0
    %225 = vmatmul.mubr.bf16.gmra.mxu0 %v110
    %v226 = vpop.f32.mrf.mxu0
    %v227 = vadd.f32 0.0, %v226
    %v228 = vpop.f32.mrf.mxu0
    %v229 = vpop.f32.mrf.mxu0
    %v230 = vadd.f32 0.0, %v229
    %v231 = vpop.f32.mrf.mxu0
    %232 = vmatprep.mubr.bf16.mxu0 0
    %233 = vmatmul.mubr.bf16.gmra.mxu0 %v113
    %v234 = vpop.f32.mrf.mxu0
    %v235 = vadd.f32 0.0, %v234
    %v236 = vpop.f32.mrf.mxu0
    %v237 = vpop.f32.mrf.mxu0
    %v238 = vadd.f32 0.0, %v237
    %v239 = vpop.f32.mrf.mxu0
    %240 = vmatprep.mubr.bf16.mxu0 0
    %241 = vmatmul.mubr.bf16.gmra.mxu0 %v116
    %v242 = vpop.f32.mrf.mxu0
    %v243 = vadd.f32 0.0, %v242
    %v244 = vpop.f32.mrf.mxu0
    %v245 = vpop.f32.mrf.mxu0
    %v246 = vadd.f32 0.0, %v245
    %v247 = vpop.f32.mrf.mxu0
    %248 = vmatprep.mubr.bf16.mxu0 0
    %249 = vmatmul.mubr.bf16.gmra.mxu0 %v119
    %v250 = vpop.f32.mrf.mxu0
    %v251 = vadd.f32 0.0, %v250
    %v252 = vpop.f32.mrf.mxu0
    %v253 = vpop.f32.mrf.mxu0
    %v254 = vadd.f32 0.0, %v253
    %v255 = vpop.f32.mrf.mxu0
    %256 = vmatprep.mubr.bf16.mxu0 0
    %257 = vmatmul.mubr.bf16.gmra.mxu0 %v122
    %v258 = vpop.f32.mrf.mxu0
    %v259 = vadd.f32 0.0, %v258
    %v260 = vpop.f32.mrf.mxu0
    %v261 = vpop.f32.mrf.mxu0
    %v262 = vadd.f32 0.0, %v261
    %v263 = vpop.f32.mrf.mxu0
    %264 = vmatprep.mubr.bf16.mxu0 0
    %265 = vmatmul.mubr.bf16.gmra.mxu0 %v125
    %v266 = vpop.f32.mrf.mxu0
    %v267 = vadd.f32 0.0, %v266
    %v268 = vpop.f32.mrf.mxu0
    %v269 = vpop.f32.mrf.mxu0
    %v270 = vadd.f32 0.0, %v269
    %v271 = vpop.f32.mrf.mxu0
    %272 = vmatprep.mubr.bf16.mxu0 0
    %273 = vmatmul.mubr.bf16.gmra.mxu0 %v128
    %v274 = vpop.f32.mrf.mxu0
    %v275 = vadd.f32 0.0, %v274
    %v276 = vpop.f32.mrf.mxu0
    %v277 = vpop.f32.mrf.mxu0
    %v278 = vadd.f32 0.0, %v277
    %v279 = vpop.f32.mrf.mxu0
    %280 = vmatprep.mubr.bf16.mxu0 0
    %281 = vmatmul.mubr.bf16.gmra.mxu0 %v131
    %v282 = vpop.f32.mrf.mxu0
    %v283 = vadd.f32 0.0, %v282
    %v284 = vpop.f32.mrf.mxu0
    %v285 = vpop.f32.mrf.mxu0
    %v286 = vadd.f32 0.0, %v285
    %v287 = vpop.f32.mrf.mxu0
    %288 = vmatprep.mubr.bf16.mxu0 0
    %289 = vmatmul.mubr.bf16.gmra.mxu0 %v134
    %v290 = vpop.f32.mrf.mxu0
    %v291 = vadd.f32 0.0, %v290
    %v292 = vpop.f32.mrf.mxu0
    %v293 = vpop.f32.mrf.mxu0
    %v294 = vadd.f32 0.0, %v293
    %v295 = vpop.f32.mrf.mxu0
    %296 = vdwg.mxu0
    %v297 = vpack.c.bf16 %v174, %v171
    %v298 = vpack.c.bf16 %v182, %v179
    %v299 = vpack.c.bf16 %v190, %v187
    %v300 = vpack.c.bf16 %v198, %v195
    %v301 = vpack.c.bf16 %v206, %v203
    %v302 = vpack.c.bf16 %v214, %v211
    %v303 = vpack.c.bf16 %v222, %v219
    %v304 = vpack.c.bf16 %v230, %v227
    %v305 = vpack.c.bf16 %v238, %v235
    %v306 = vpack.c.bf16 %v246, %v243
    %v307 = vpack.c.bf16 %v254, %v251
    %v308 = vpack.c.bf16 %v262, %v259
    %v309 = vpack.c.bf16 %v270, %v267
    %v310 = vpack.c.bf16 %v278, %v275
    %v311 = vpack.c.bf16 %v286, %v283
    %v312 = vpack.c.bf16 %v294, %v291
    %v329 = vunpack.c.l.b16 %v297
    %v330 = vunpack.c.h.b16 %v297
    %v331 = vunpack.c.l.b16 %v298
    %v332 = vunpack.c.h.b16 %v298
    %v333 = vunpack.c.l.b16 %v299
    %v334 = vunpack.c.h.b16 %v299
    %v335 = vunpack.c.l.b16 %v300
    %v336 = vunpack.c.h.b16 %v300
    %v337 = vunpack.c.l.b16 %v301
    %v338 = vunpack.c.h.b16 %v301
    %v339 = vunpack.c.l.b16 %v302
    %v340 = vunpack.c.h.b16 %v302
    %v341 = vunpack.c.l.b16 %v303
    %v342 = vunpack.c.h.b16 %v303
    %v343 = vunpack.c.l.b16 %v304
    %v344 = vunpack.c.h.b16 %v304
    %v345 = vunpack.c.l.b16 %v305
    %v346 = vunpack.c.h.b16 %v305
    %v347 = vunpack.c.l.b16 %v306
    %v348 = vunpack.c.h.b16 %v306
    %v349 = vunpack.c.l.b16 %v307
    %v350 = vunpack.c.h.b16 %v307
    %v351 = vunpack.c.l.b16 %v308
    %v352 = vunpack.c.h.b16 %v308
    %v353 = vunpack.c.l.b16 %v309
    %v354 = vunpack.c.h.b16 %v309
    %v355 = vunpack.c.l.b16 %v310
    %v356 = vunpack.c.h.b16 %v310
    %v357 = vunpack.c.l.b16 %v311
    %v358 = vunpack.c.h.b16 %v311
    %v359 = vunpack.c.l.b16 %v312
    %v360 = vunpack.c.h.b16 %v312
    %v361 = vpack.c.b16 %v329, %v329
    %v362 = vpack.c.b16 %v330, %v330
    %v363 = vpack.c.b16 %v331, %v331
    %v364 = vpack.c.b16 %v332, %v332
    %v365 = vpack.c.b16 %v333, %v333
    %v366 = vpack.c.b16 %v334, %v334
    %v367 = vpack.c.b16 %v335, %v335
    %v368 = vpack.c.b16 %v336, %v336
    %v369 = vpack.c.b16 %v337, %v337
    %v370 = vpack.c.b16 %v338, %v338
    %v371 = vpack.c.b16 %v339, %v339
    %v372 = vpack.c.b16 %v340, %v340
    %v373 = vpack.c.b16 %v341, %v341
    %v374 = vpack.c.b16 %v342, %v342
    %v375 = vpack.c.b16 %v343, %v343
    %v376 = vpack.c.b16 %v344, %v344
    %v377 = vpack.c.b16 %v345, %v345
    %v378 = vpack.c.b16 %v346, %v346
    %v379 = vpack.c.b16 %v347, %v347
    %v380 = vpack.c.b16 %v348, %v348
    %v381 = vpack.c.b16 %v349, %v349
    %v382 = vpack.c.b16 %v350, %v350
    %v383 = vpack.c.b16 %v351, %v351
    %v384 = vpack.c.b16 %v352, %v352
    %v385 = vpack.c.b16 %v353, %v353
    %v386 = vpack.c.b16 %v354, %v354
    %v387 = vpack.c.b16 %v355, %v355
    %v388 = vpack.c.b16 %v356, %v356
    %v389 = vpack.c.b16 %v357, %v357
    %v390 = vpack.c.b16 %v358, %v358
    %v391 = vpack.c.b16 %v359, %v359
    %v392 = vpack.c.b16 %v360, %v360
    %425 = vst [vmem:[#allocation2] sm:$0xf] %v361
    %426 = vst [vmem:[#allocation2 + $0x4] sm:$0xf] %v362
    %427 = vst [vmem:[#allocation2 + $0x8] sm:$0xf] %v363
    %428 = vst [vmem:[#allocation2 + $0xc] sm:$0xf] %v364
    %429 = vst [vmem:[#allocation2 + $0x10] sm:$0xf] %v365
    %430 = vst [vmem:[#allocation2 + $0x14] sm:$0xf] %v366
    %431 = vst [vmem:[#allocation2 + $0x18] sm:$0xf] %v367
    %432 = vst [vmem:[#allocation2 + $0x1c] sm:$0xf] %v368
    %433 = vst [vmem:[#allocation2 + $0x20] sm:$0xf] %v369
    %434 = vst [vmem:[#allocation2 + $0x24] sm:$0xf] %v370
    %435 = vst [vmem:[#allocation2 + $0x28] sm:$0xf] %v371
    %436 = vst [vmem:[#allocation2 + $0x2c] sm:$0xf] %v372
    %437 = vst [vmem:[#allocation2 + $0x30] sm:$0xf] %v373
    %438 = vst [vmem:[#allocation2 + $0x34] sm:$0xf] %v374
    %439 = vst [vmem:[#allocation2 + $0x38] sm:$0xf] %v375
    %440 = vst [vmem:[#allocation2 + $0x3c] sm:$0xf] %v376
    %441 = vst [vmem:[#allocation2 + $0x40] sm:$0xf] %v377
    %442 = vst [vmem:[#allocation2 + $0x44] sm:$0xf] %v378
    %443 = vst [vmem:[#allocation2 + $0x48] sm:$0xf] %v379
    %444 = vst [vmem:[#allocation2 + $0x4c] sm:$0xf] %v380
    %445 = vst [vmem:[#allocation2 + $0x50] sm:$0xf] %v381
    %446 = vst [vmem:[#allocation2 + $0x54] sm:$0xf] %v382
    %447 = vst [vmem:[#allocation2 + $0x58] sm:$0xf] %v383
    %448 = vst [vmem:[#allocation2 + $0x5c] sm:$0xf] %v384
    %449 = vst [vmem:[#allocation2 + $0x60] sm:$0xf] %v385
    %450 = vst [vmem:[#allocation2 + $0x64] sm:$0xf] %v386
    %451 = vst [vmem:[#allocation2 + $0x68] sm:$0xf] %v387
    %452 = vst [vmem:[#allocation2 + $0x6c] sm:$0xf] %v388
    %453 = vst [vmem:[#allocation2 + $0x70] sm:$0xf] %v389
    %454 = vst [vmem:[#allocation2 + $0x74] sm:$0xf] %v390
    %455 = vst [vmem:[#allocation2 + $0x78] sm:$0xf] %v391
    %456 = vst [vmem:[#allocation2 + $0x7c] sm:$0xf] %v392
    %v457 = vld [vmem:[%s2] sm:$0xff]
    %v458 = vld [vmem:[%s2 + $0x8] sm:$0xff]
    %v459 = vld [vmem:[%s2 + $0x10] sm:$0xff]
    %v460 = vld [vmem:[%s2 + $0x18] sm:$0xff]
    %v462 = vsel %vm87, %v23, 0
    %v465 = vsel %vm87, %v24, 0
    %v468 = vsel %vm87, %v25, 0
    %v471 = vsel %vm87, %v26, 0
    %v474 = vsel %vm87, %v27, 0
    %v477 = vsel %vm87, %v28, 0
    %v480 = vsel %vm87, %v29, 0
    %v483 = vsel %vm87, %v30, 0
    %v486 = vsel %vm87, %v31, 0
    %v489 = vsel %vm87, %v32, 0
    %v492 = vsel %vm87, %v33, 0
    %v495 = vsel %vm87, %v34, 0
    %v498 = vsel %vm87, %v35, 0
    %v501 = vsel %vm87, %v36, 0
    %v504 = vsel %vm87, %v37, 0
    %v507 = vsel %vm87, %v38, 0
    %v510 = vsel %vm87, %v39, 0
    %v513 = vsel %vm87, %v40, 0
    %v516 = vsel %vm87, %v41, 0
    %v519 = vsel %vm87, %v42, 0
    %v522 = vsel %vm87, %v43, 0
    %v525 = vsel %vm87, %v44, 0
    %v528 = vsel %vm87, %v45, 0
    %v531 = vsel %vm87, %v46, 0
    %v534 = vsel %vm87, %v47, 0
    %v537 = vsel %vm87, %v48, 0
    %v540 = vsel %vm87, %v49, 0
    %v543 = vsel %vm87, %v50, 0
    %v546 = vsel %vm87, %v51, 0
    %v549 = vsel %vm87, %v52, 0
    %v552 = vsel %vm87, %v53, 0
    %v555 = vsel %vm87, %v54, 0
    %557 = vmatprep.subr.mxu0 0.0
    %558 = vmatpush1.msra.mxu0 0.0
    %559 = vmatprep.subr.mxu0 0.0
    %560 = vmatpush1.msra.mxu0 0.0
    %561 = vmatprep.subr.mxu0 0.0
    %562 = vmatpush1.msra.mxu0 0.0
    %563 = vmatprep.subr.mxu0 0.0
    %564 = vmatpush1.msra.mxu0 0.0
    %565 = vmatprep.subr.mxu0 0.0
    %566 = vmatpush1.msra.mxu0 0.0
    %567 = vmatprep.subr.mxu0 0.0
    %568 = vmatpush1.msra.mxu0 0.0
    %569 = vmatprep.subr.mxu0 0.0
    %570 = vmatpush1.msra.mxu0 0.0
    %571 = vmatprep.subr.mxu0 0.0
    %572 = vmatpush1.msra.mxu0 0.0
    %573 = vmatprep.subr.mxu0 0.0
    %574 = vmatpush1.msra.mxu0 0.0
    %575 = vmatprep.subr.mxu0 0.0
    %576 = vmatpush1.msra.mxu0 0.0
    %577 = vmatprep.subr.mxu0 0.0
    %578 = vmatpush1.msra.mxu0 0.0
    %579 = vmatprep.subr.mxu0 0.0
    %580 = vmatpush1.msra.mxu0 0.0
    %581 = vmatprep.subr.mxu0 0.0
    %582 = vmatpush1.msra.mxu0 %v460
    %583 = vmatprep.subr.mxu0 0.0
    %584 = vmatpush1.msra.mxu0 %v459
    %585 = vmatprep.subr.mxu0 0.0
    %586 = vmatpush1.msra.mxu0 %v458
    %587 = vmatprep.subr.mxu0 0.0
    %588 = vmatpush1.msra.mxu0 %v457
    %589 = vmatprep.subr.mxu0 0.0
    %590 = vmatpush2.msra.mxu0 0.0
    %591 = vmatprep.subr.mxu0 0.0
    %592 = vmatpush2.msra.mxu0 0.0
    %593 = vmatprep.subr.mxu0 0.0
    %594 = vmatpush2.msra.mxu0 0.0
    %595 = vmatprep.subr.mxu0 0.0
    %596 = vmatpush2.msra.mxu0 0.0
    %597 = vmatprep.subr.mxu0 0.0
    %598 = vmatpush2.msra.mxu0 0.0
    %599 = vmatprep.subr.mxu0 0.0
    %600 = vmatpush2.msra.mxu0 0.0
    %601 = vmatprep.subr.mxu0 0.0
    %602 = vmatpush2.msra.mxu0 0.0
    %603 = vmatprep.subr.mxu0 0.0
    %604 = vmatpush2.msra.mxu0 0.0
    %605 = vmatprep.subr.mxu0 0.0
    %606 = vmatpush2.msra.mxu0 0.0
    %607 = vmatprep.subr.mxu0 0.0
    %608 = vmatpush2.msra.mxu0 0.0
    %609 = vmatprep.subr.mxu0 0.0
    %610 = vmatpush2.msra.mxu0 0.0
    %611 = vmatprep.subr.mxu0 0.0
    %612 = vmatpush2.msra.mxu0 0.0
    %613 = vmatprep.subr.mxu0 0.0
    %614 = vmatpush2.msra.mxu0 0.0
    %615 = vmatprep.subr.mxu0 0.0
    %616 = vmatpush2.msra.mxu0 0.0
    %617 = vmatprep.subr.mxu0 0.0
    %618 = vmatpush2.msra.mxu0 0.0
    %619 = vmatprep.subr.mxu0 0.0
    %620 = vmatpush2.msra.mxu0 0.0
    %621 = vmatprep.mubr.f32.mxu0 0.0
    %622 = vmatmul.mubr.f32.gmra.mxu0 %v462
    %v623 = vpop.f32.mrf.mxu0
    %v624 = vadd.f32 0.0, %v623
    %v625 = vpop.f32.mrf.mxu0
    %626 = vmatprep.mubr.f32.mxu0 0.0
    %627 = vmatmul.mubr.f32.gmra.mxu0 %v465
    %v628 = vpop.f32.mrf.mxu0
    %v629 = vadd.f32 0.0, %v628
    %v630 = vpop.f32.mrf.mxu0
    %631 = vmatprep.mubr.f32.mxu0 0.0
    %632 = vmatmul.mubr.f32.gmra.mxu0 %v468
    %v633 = vpop.f32.mrf.mxu0
    %v634 = vadd.f32 0.0, %v633
    %v635 = vpop.f32.mrf.mxu0
    %636 = vmatprep.mubr.f32.mxu0 0.0
    %637 = vmatmul.mubr.f32.gmra.mxu0 %v471
    %v638 = vpop.f32.mrf.mxu0
    %v639 = vadd.f32 0.0, %v638
    %v640 = vpop.f32.mrf.mxu0
    %641 = vmatprep.mubr.f32.mxu0 0.0
    %642 = vmatmul.mubr.f32.gmra.mxu0 %v474
    %v643 = vpop.f32.mrf.mxu0
    %v644 = vadd.f32 0.0, %v643
    %v645 = vpop.f32.mrf.mxu0
    %646 = vmatprep.mubr.f32.mxu0 0.0
    %647 = vmatmul.mubr.f32.gmra.mxu0 %v477
    %v648 = vpop.f32.mrf.mxu0
    %v649 = vadd.f32 0.0, %v648
    %v650 = vpop.f32.mrf.mxu0
    %651 = vmatprep.mubr.f32.mxu0 0.0
    %652 = vmatmul.mubr.f32.gmra.mxu0 %v480
    %v653 = vpop.f32.mrf.mxu0
    %v654 = vadd.f32 0.0, %v653
    %v655 = vpop.f32.mrf.mxu0
    %656 = vmatprep.mubr.f32.mxu0 0.0
    %657 = vmatmul.mubr.f32.gmra.mxu0 %v483
    %v658 = vpop.f32.mrf.mxu0
    %v659 = vadd.f32 0.0, %v658
    %v660 = vpop.f32.mrf.mxu0
    %661 = vmatprep.mubr.f32.mxu0 0.0
    %662 = vmatmul.mubr.f32.gmra.mxu0 %v486
    %v663 = vpop.f32.mrf.mxu0
    %v664 = vadd.f32 0.0, %v663
    %v665 = vpop.f32.mrf.mxu0
    %666 = vmatprep.mubr.f32.mxu0 0.0
    %667 = vmatmul.mubr.f32.gmra.mxu0 %v489
    %v668 = vpop.f32.mrf.mxu0
    %v669 = vadd.f32 0.0, %v668
    %v670 = vpop.f32.mrf.mxu0
    %671 = vmatprep.mubr.f32.mxu0 0.0
    %672 = vmatmul.mubr.f32.gmra.mxu0 %v492
    %v673 = vpop.f32.mrf.mxu0
    %v674 = vadd.f32 0.0, %v673
    %v675 = vpop.f32.mrf.mxu0
    %676 = vmatprep.mubr.f32.mxu0 0.0
    %677 = vmatmul.mubr.f32.gmra.mxu0 %v495
    %v678 = vpop.f32.mrf.mxu0
    %v679 = vadd.f32 0.0, %v678
    %v680 = vpop.f32.mrf.mxu0
    %681 = vmatprep.mubr.f32.mxu0 0.0
    %682 = vmatmul.mubr.f32.gmra.mxu0 %v498
    %v683 = vpop.f32.mrf.mxu0
    %v684 = vadd.f32 0.0, %v683
    %v685 = vpop.f32.mrf.mxu0
    %686 = vmatprep.mubr.f32.mxu0 0.0
    %687 = vmatmul.mubr.f32.gmra.mxu0 %v501
    %v688 = vpop.f32.mrf.mxu0
    %v689 = vadd.f32 0.0, %v688
    %v690 = vpop.f32.mrf.mxu0
    %691 = vmatprep.mubr.f32.mxu0 0.0
    %692 = vmatmul.mubr.f32.gmra.mxu0 %v504
    %v693 = vpop.f32.mrf.mxu0
    %v694 = vadd.f32 0.0, %v693
    %v695 = vpop.f32.mrf.mxu0
    %696 = vmatprep.mubr.f32.mxu0 0.0
    %697 = vmatmul.mubr.f32.gmra.mxu0 %v507
    %v698 = vpop.f32.mrf.mxu0
    %v699 = vadd.f32 0.0, %v698
    %v700 = vpop.f32.mrf.mxu0
    %701 = vmatprep.mubr.f32.mxu0 0.0
    %702 = vmatmul.mubr.f32.gmra.mxu0 %v510
    %v703 = vpop.f32.mrf.mxu0
    %v704 = vadd.f32 0.0, %v703
    %v705 = vpop.f32.mrf.mxu0
    %706 = vmatprep.mubr.f32.mxu0 0.0
    %707 = vmatmul.mubr.f32.gmra.mxu0 %v513
    %v708 = vpop.f32.mrf.mxu0
    %v709 = vadd.f32 0.0, %v708
    %v710 = vpop.f32.mrf.mxu0
    %711 = vmatprep.mubr.f32.mxu0 0.0
    %712 = vmatmul.mubr.f32.gmra.mxu0 %v516
    %v713 = vpop.f32.mrf.mxu0
    %v714 = vadd.f32 0.0, %v713
    %v715 = vpop.f32.mrf.mxu0
    %716 = vmatprep.mubr.f32.mxu0 0.0
    %717 = vmatmul.mubr.f32.gmra.mxu0 %v519
    %v718 = vpop.f32.mrf.mxu0
    %v719 = vadd.f32 0.0, %v718
    %v720 = vpop.f32.mrf.mxu0
    %721 = vmatprep.mubr.f32.mxu0 0.0
    %722 = vmatmul.mubr.f32.gmra.mxu0 %v522
    %v723 = vpop.f32.mrf.mxu0
    %v724 = vadd.f32 0.0, %v723
    %v725 = vpop.f32.mrf.mxu0
    %726 = vmatprep.mubr.f32.mxu0 0.0
    %727 = vmatmul.mubr.f32.gmra.mxu0 %v525
    %v728 = vpop.f32.mrf.mxu0
    %v729 = vadd.f32 0.0, %v728
    %v730 = vpop.f32.mrf.mxu0
    %731 = vmatprep.mubr.f32.mxu0 0.0
    %732 = vmatmul.mubr.f32.gmra.mxu0 %v528
    %v733 = vpop.f32.mrf.mxu0
    %v734 = vadd.f32 0.0, %v733
    %v735 = vpop.f32.mrf.mxu0
    %736 = vmatprep.mubr.f32.mxu0 0.0
    %737 = vmatmul.mubr.f32.gmra.mxu0 %v531
    %v738 = vpop.f32.mrf.mxu0
    %v739 = vadd.f32 0.0, %v738
    %v740 = vpop.f32.mrf.mxu0
    %741 = vmatprep.mubr.f32.mxu0 0.0
    %742 = vmatmul.mubr.f32.gmra.mxu0 %v534
    %v743 = vpop.f32.mrf.mxu0
    %v744 = vadd.f32 0.0, %v743
    %v745 = vpop.f32.mrf.mxu0
    %746 = vmatprep.mubr.f32.mxu0 0.0
    %747 = vmatmul.mubr.f32.gmra.mxu0 %v537
    %v748 = vpop.f32.mrf.mxu0
    %v749 = vadd.f32 0.0, %v748
    %v750 = vpop.f32.mrf.mxu0
    %751 = vmatprep.mubr.f32.mxu0 0.0
    %752 = vmatmul.mubr.f32.gmra.mxu0 %v540
    %v753 = vpop.f32.mrf.mxu0
    %v754 = vadd.f32 0.0, %v753
    %v755 = vpop.f32.mrf.mxu0
    %756 = vmatprep.mubr.f32.mxu0 0.0
    %757 = vmatmul.mubr.f32.gmra.mxu0 %v543
    %v758 = vpop.f32.mrf.mxu0
    %v759 = vadd.f32 0.0, %v758
    %v760 = vpop.f32.mrf.mxu0
    %761 = vmatprep.mubr.f32.mxu0 0.0
    %762 = vmatmul.mubr.f32.gmra.mxu0 %v546
    %v763 = vpop.f32.mrf.mxu0
    %v764 = vadd.f32 0.0, %v763
    %v765 = vpop.f32.mrf.mxu0
    %766 = vmatprep.mubr.f32.mxu0 0.0
    %767 = vmatmul.mubr.f32.gmra.mxu0 %v549
    %v768 = vpop.f32.mrf.mxu0
    %v769 = vadd.f32 0.0, %v768
    %v770 = vpop.f32.mrf.mxu0
    %771 = vmatprep.mubr.f32.mxu0 0.0
    %772 = vmatmul.mubr.f32.gmra.mxu0 %v552
    %v773 = vpop.f32.mrf.mxu0
    %v774 = vadd.f32 0.0, %v773
    %v775 = vpop.f32.mrf.mxu0
    %776 = vmatprep.mubr.f32.mxu0 0.0
    %777 = vmatmul.mubr.f32.gmra.mxu0 %v555
    %v778 = vpop.f32.mrf.mxu0
    %v779 = vadd.f32 0.0, %v778
    %v780 = vpop.f32.mrf.mxu0
    %781 = vdwg.mxu0
    %vm782 = vcmask 7168
    %783 = vst.msk [vmem:[%s5] sm:$0xff] %vm782, %v624
    %784 = vst.msk [vmem:[%s5 + $0x8] sm:$0xff] %vm782, %v629
    %785 = vst.msk [vmem:[%s5 + $0x10] sm:$0xff] %vm782, %v634
    %786 = vst.msk [vmem:[%s5 + $0x18] sm:$0xff] %vm782, %v639
    %787 = vst.msk [vmem:[%s5 + $0x20] sm:$0xff] %vm782, %v644
    %788 = vst.msk [vmem:[%s5 + $0x28] sm:$0xff] %vm782, %v649
    %789 = vst.msk [vmem:[%s5 + $0x30] sm:$0xff] %vm782, %v654
    %790 = vst.msk [vmem:[%s5 + $0x38] sm:$0xff] %vm782, %v659
    %791 = vst.msk [vmem:[%s5 + $0x40] sm:$0xff] %vm782, %v664
    %792 = vst.msk [vmem:[%s5 + $0x48] sm:$0xff] %vm782, %v669
    %793 = vst.msk [vmem:[%s5 + $0x50] sm:$0xff] %vm782, %v674
    %794 = vst.msk [vmem:[%s5 + $0x58] sm:$0xff] %vm782, %v679
    %795 = vst.msk [vmem:[%s5 + $0x60] sm:$0xff] %vm782, %v684
    %796 = vst.msk [vmem:[%s5 + $0x68] sm:$0xff] %vm782, %v689
    %797 = vst.msk [vmem:[%s5 + $0x70] sm:$0xff] %vm782, %v694
    %798 = vst.msk [vmem:[%s5 + $0x78] sm:$0xff] %vm782, %v699
    %799 = vst.msk [vmem:[%s5 + $0x80] sm:$0xff] %vm782, %v704
    %800 = vst.msk [vmem:[%s5 + $0x88] sm:$0xff] %vm782, %v709
    %801 = vst.msk [vmem:[%s5 + $0x90] sm:$0xff] %vm782, %v714
    %802 = vst.msk [vmem:[%s5 + $0x98] sm:$0xff] %vm782, %v719
    %803 = vst.msk [vmem:[%s5 + $0xa0] sm:$0xff] %vm782, %v724
    %804 = vst.msk [vmem:[%s5 + $0xa8] sm:$0xff] %vm782, %v729
    %805 = vst.msk [vmem:[%s5 + $0xb0] sm:$0xff] %vm782, %v734
    %806 = vst.msk [vmem:[%s5 + $0xb8] sm:$0xff] %vm782, %v739
    %807 = vst.msk [vmem:[%s5 + $0xc0] sm:$0xff] %vm782, %v744
    %808 = vst.msk [vmem:[%s5 + $0xc8] sm:$0xff] %vm782, %v749
    %809 = vst.msk [vmem:[%s5 + $0xd0] sm:$0xff] %vm782, %v754
    %810 = vst.msk [vmem:[%s5 + $0xd8] sm:$0xff] %vm782, %v759
    %811 = vst.msk [vmem:[%s5 + $0xe0] sm:$0xff] %vm782, %v764
    %812 = vst.msk [vmem:[%s5 + $0xe8] sm:$0xff] %vm782, %v769
    %813 = vst.msk [vmem:[%s5 + $0xf0] sm:$0xff] %vm782, %v774
    %814 = vst.msk [vmem:[%s5 + $0xf8] sm:$0xff] %vm782, %v779
    %v815 = vld [vmem:[%s3] sm:$0x1]
    %v817 = vsel %vm87, %v815, 0
    %819 = vmatprep.subr.mxu0 0.0
    %820 = vmatpush1.xpose.msra.mxu0 %v507
    %821 = vmatprep.subr.mxu0 0.0
    %822 = vmatpush1.xpose.msra.mxu0 %v504
    %823 = vmatprep.subr.mxu0 0.0
    %824 = vmatpush1.xpose.msra.mxu0 %v501
    %825 = vmatprep.subr.mxu0 0.0
    %826 = vmatpush1.xpose.msra.mxu0 %v498
    %827 = vmatprep.subr.mxu0 0.0
    %828 = vmatpush1.xpose.msra.mxu0 %v495
    %829 = vmatprep.subr.mxu0 0.0
    %830 = vmatpush1.xpose.msra.mxu0 %v492
    %831 = vmatprep.subr.mxu0 0.0
    %832 = vmatpush1.xpose.msra.mxu0 %v489
    %833 = vmatprep.subr.mxu0 0.0
    %834 = vmatpush1.xpose.msra.mxu0 %v486
    %835 = vmatprep.subr.mxu0 0.0
    %836 = vmatpush1.xpose.msra.mxu0 %v483
    %837 = vmatprep.subr.mxu0 0.0
    %838 = vmatpush1.xpose.msra.mxu0 %v480
    %839 = vmatprep.subr.mxu0 0.0
    %840 = vmatpush1.xpose.msra.mxu0 %v477
    %841 = vmatprep.subr.mxu0 0.0
    %842 = vmatpush1.xpose.msra.mxu0 %v474
    %843 = vmatprep.subr.mxu0 0.0
    %844 = vmatpush1.xpose.msra.mxu0 %v471
    %845 = vmatprep.subr.mxu0 0.0
    %846 = vmatpush1.xpose.msra.mxu0 %v468
    %847 = vmatprep.subr.mxu0 0.0
    %848 = vmatpush1.xpose.msra.mxu0 %v465
    %849 = vmatprep.subr.mxu0 0.0
    %850 = vmatpush1.xpose.msra.mxu0 %v462
    %851 = vmatprep.subr.mxu0 0.0
    %852 = vmatpush2.xpose.msra.mxu0 %v555
    %853 = vmatprep.subr.mxu0 0.0
    %854 = vmatpush2.xpose.msra.mxu0 %v552
    %855 = vmatprep.subr.mxu0 0.0
    %856 = vmatpush2.xpose.msra.mxu0 %v549
    %857 = vmatprep.subr.mxu0 0.0
    %858 = vmatpush2.xpose.msra.mxu0 %v546
    %859 = vmatprep.subr.mxu0 0.0
    %860 = vmatpush2.xpose.msra.mxu0 %v543
    %861 = vmatprep.subr.mxu0 0.0
    %862 = vmatpush2.xpose.msra.mxu0 %v540
    %863 = vmatprep.subr.mxu0 0.0
    %864 = vmatpush2.xpose.msra.mxu0 %v537
    %865 = vmatprep.subr.mxu0 0.0
    %866 = vmatpush2.xpose.msra.mxu0 %v534
    %867 = vmatprep.subr.mxu0 0.0
    %868 = vmatpush2.xpose.msra.mxu0 %v531
    %869 = vmatprep.subr.mxu0 0.0
    %870 = vmatpush2.xpose.msra.mxu0 %v528
    %871 = vmatprep.subr.mxu0 0.0
    %872 = vmatpush2.xpose.msra.mxu0 %v525
    %873 = vmatprep.subr.mxu0 0.0
    %874 = vmatpush2.xpose.msra.mxu0 %v522
    %875 = vmatprep.subr.mxu0 0.0
    %876 = vmatpush2.xpose.msra.mxu0 %v519
    %877 = vmatprep.subr.mxu0 0.0
    %878 = vmatpush2.xpose.msra.mxu0 %v516
    %879 = vmatprep.subr.mxu0 0.0
    %880 = vmatpush2.xpose.msra.mxu0 %v513
    %881 = vmatprep.subr.mxu0 0.0
    %882 = vmatpush2.xpose.msra.mxu0 %v510
    %883 = vmatprep.mubr.f32.mxu0 0.0
    %884 = vmatmul.mubr.f32.gmra.mxu0 %v817
    %v885 = vpop.f32.mrf.mxu0
    %v886 = vadd.f32 0.0, %v885
    %v887 = vpop.f32.mrf.mxu0
    %v888 = vadd.f32 0.0, %v887
    %889 = vdwg.mxu0
    %v892 = vcombine.low %v886, %v888
    %v894 = vunpack.c.l.s4 1966171168
    %v895 = vunpack.c.0.s8 %v894
    %v896 = vlaneseq
    %v897 = vshrl.u32 %v896, 7
    %v898 = vsub.s32 %v895, %v897
    %v899 = vrot.slane %v892, %v898
    %v901 = vunpack.c.l.s4 1966171168
    %v902 = vunpack.c.0.s8 %v901
    %v903 = vlaneseq
    %v904 = vshrl.u32 %v903, 7
    %v905 = vsub.s32 %v902, %v904
    %v906 = vrot.slane %v899, %v905
    %v908 = vlaneseq
    %vm909 = vcmp.ge.s32.totalorder %v908, 0
    %vm910 = vcmp.lt.s32.totalorder %v908, 256
    %vm911 = vmand %vm909, %vm910
    %912 = vst.msk [vmem:[#allocation4] sm:$0x3] %vm911, %v906
    // Predicated region
    $region18: #{tpu_custom_call.1} parent=1 // pred_check
      _
    $region19: #{tpu_custom_call.1} parent=1 // pred_check_branch
      %914 = sbr.rel (0) target = $region21
    $region20: #{tpu_custom_call.1} parent=1 // pred_region
      %s916 = ssub.s32 2048, 2048
      %917 = vsyncadd [#allocation3], %s916
      %s918 = sshll.u32 [#allocation2], 4
      %s919 = int_to_ptr.vmem [resolvable:$true] %s918
      %924 = dma.vmem_to_hbm [thread:$0]  %s919, 2048, %s4, [#allocation3], 64, 64, 4
    $region21: #{tpu_custom_call.1} parent=1 // pred_fallthru
      _
    // Predicated region
    $region22: #{tpu_custom_call.1} parent=1 // pred_check
      _
    $region23: #{tpu_custom_call.1} parent=1 // pred_check_branch
      %926 = sbr.rel (0) target = $region25
    $region24: #{tpu_custom_call.1} parent=1 // pred_region
      _
    $region25: #{tpu_custom_call.1} parent=1 // pred_fallthru
      _
    // Predicated region
    $region26: #{tpu_custom_call.1} parent=1 // pred_check
      _
    $region27: #{tpu_custom_call.1} parent=1 // pred_check_branch
      %928 = sbr.rel (0) target = $region29
    $region28: #{tpu_custom_call.1} parent=1 // pred_region
      %s930 = ssub.s32 32, 32
      %931 = vsyncadd [#allocation5], %s930
      %s933 = sshll.u32 [#allocation4], 4
      %s934 = int_to_ptr.vmem [resolvable:$true] %s933
      %936 = dma.vmem_to_hbm [thread:$0]  %s934, 32, %s6, [#allocation5]
    $region29: #{tpu_custom_call.1} parent=1 // pred_fallthru
      _
    // Predicated region
    $region30: #{tpu_custom_call.1} parent=1 // pred_check
      _
    $region31: #{tpu_custom_call.1} parent=1 // pred_check_branch
      %938 = sbr.rel (0) target = $region33
    $region32: #{tpu_custom_call.1} parent=1 // pred_region
      %939 = dma.done [#allocation3], 2048
    $region33: #{tpu_custom_call.1} parent=1 // pred_fallthru
      _
    // Predicated region
    $region34: #{tpu_custom_call.1} parent=1 // pred_check
      _
    $region35: #{tpu_custom_call.1} parent=1 // pred_check_branch
      %941 = sbr.rel (0) target = $region37
    $region36: #{tpu_custom_call.1} parent=1 // pred_region
      _
    $region37: #{tpu_custom_call.1} parent=1 // pred_fallthru
      _
    // Predicated region
    $region38: #{tpu_custom_call.1} parent=1 // pred_check
      _
    $region39: #{tpu_custom_call.1} parent=1 // pred_check_branch
      %943 = sbr.rel (0) target = $region41
    $region40: #{tpu_custom_call.1} parent=1 // pred_region
      %944 = dma.done [#allocation5], 32
    $region41: #{tpu_custom_call.1} parent=1 // pred_fallthru
      _
    %945 = vsyncpa [#allocation3], 1
    %946 = vsyncpa [#allocation5], 1

</llo_original>
